<compile_context>
chip_gen: v7x
topology: tpu7x:2x2x1
jax: 0.10.0
libtpu: 0.0.40
codegen_flags: <defaults>
</compile_context>

<pallas_src>
import numpy as np
import jax
import jax.numpy as jnp
from jax import lax
from jax.experimental import pallas as pl
from jax.experimental.pallas import tpu as pltpu


# Conservative pipeline working-set budget: 2 inputs x 2 pipeline buffers x f32.
# Sized to sit comfortably inside v5e's 16 MiB scoped-VMEM default and far under
# v7x's 64 MiB physical VMEM, while keeping blocks big enough (>=1 MiB) to reach
# the high-percentage HBM-roofline regime.
_VMEM_PIPELINE_BUDGET = 8 * 1024 * 1024


def _pick_tile(n, cap):
    """Largest tile t dividing n with t <= cap, preferring multiples of 8."""
    if n <= cap:
        return n
    cap = max(1, cap)
    for t in range(cap - cap % 8, 0, -8):   # aligned divisors first
        if n % t == 0:
            return t
    for t in range(cap, 0, -1):             # any divisor as fallback
        if n % t == 0:
            return t
    return n


def _unweighted_kernel(out_ref, lab_ref, loss_ref, acc_ref):
    t = pl.program_id(1)

    @pl.when(t == 0)
    def _init():
        acc_ref[...] = jnp.zeros_like(acc_ref)

    out = out_ref[0].astype(jnp.float32)    # (T, LANE)
    lab = lab_ref[0].astype(jnp.float32)    # (T, LANE)
    # fused sign: accumulate the negated partial sum directly
    acc_ref[...] = acc_ref[...] - jnp.sum(lab * jnp.log(out))

    @pl.when(t == pl.num_programs(1) - 1)
    def _finalize():
        loss_ref[...] = acc_ref[...].reshape(1, 1, 1)


def _weighted_kernel(w_ref, out_ref, lab_ref, loss_ref, acc_ref):
    # w_ref: scalar-prefetch SMEM ref of shape (C,), fetched once before the grid.
    t = pl.program_id(1)

    @pl.when(t == 0)
    def _init():
        acc_ref[...] = jnp.zeros_like(acc_ref)

    out = out_ref[0].astype(jnp.float32)    # (C, T, LANE)
    lab = lab_ref[0].astype(jnp.float32)    # (C, T, LANE)
    C = lab.shape[0]

    # sum_c labels * log(output + 1e-17)  -> (T, LANE)
    s = jnp.sum(lab * jnp.log(out + 1e-17), axis=0)

    # argmax over channel, first-index tie-break (matches torch.argmax)
    max_val = jnp.max(lab, axis=0, keepdims=True)                       # (1, T, LANE)
    ch_iota = lax.broadcasted_iota(jnp.int32, lab.shape, 0)             # (C, T, LANE)
    idx = jnp.min(jnp.where(lab == max_val, ch_iota, C), axis=0)        # (T, LANE)

    # weights[idx]: unrolled select from SMEM scalars (no (C,HW) broadcast temp)
    w_sel = jnp.zeros_like(s)
    for c in range(C):
        w_sel = jnp.where(idx == c, w_ref[c], w_sel)

    acc_ref[...] = acc_ref[...] - jnp.sum(w_sel * s)

    @pl.when(t == pl.num_programs(1) - 1)
    def _finalize():
        loss_ref[...] = acc_ref[...].reshape(1, 1, 1)


def soft_cross_entropy_loss(output, labels, weights=None,
                            pipeline_budget_bytes=_VMEM_PIPELINE_BUDGET):
    """output, labels: (B, C, H, W). weights: optional (C,). Returns (B,) float32."""
    B, C, H, W = output.shape
    HW = H * W

    out_shape = jax.ShapeDtypeStruct((B, 1, 1), jnp.float32)
    cparams = pltpu.CompilerParams(
        dimension_semantics=("parallel", "arbitrary"))

    if weights is None:
        # Channel structure irrelevant -> fully lane/sublane-dense (B, S, 128).
        N = C * HW
        lane = 128 if N % 128 == 0 else N
        S = N // lane
        tile = _pick_tile(S, max(1, pipeline_budget_bytes // (16 * lane)))
        out3 = output.reshape(B, S, lane)
        lab3 = labels.reshape(B, S, lane)
        io_spec = pl.BlockSpec((1, tile, lane), lambda b, t: (b, t, 0))
        fn = pl.pallas_call(
            _unweighted_kernel,
            out_shape=out_shape,
            grid_spec=pltpu.PrefetchScalarGridSpec(
                num_scalar_prefetch=0,
                grid=(B, S // tile),
                in_specs=[io_spec, io_spec],
                out_specs=pl.BlockSpec((1, 1, 1), lambda b, t: (b, 0, 0)),
                scratch_shapes=[pltpu.VMEM((1, 1), jnp.float32)],
            ),
            compiler_params=cparams,
        )
        res = fn(out3, lab3)
    else:
        # Keep channel axis, make the spatial axis lane-dense: (B, C, S, 128).
        lane = 128 if HW % 128 == 0 else HW
        S = HW // lane
        tile = _pick_tile(S, max(1, pipeline_budget_bytes // (16 * C * lane)))
        out4 = output.reshape(B, C, S, lane)
        lab4 = labels.reshape(B, C, S, lane)
        w = jnp.asarray(weights, jnp.float32).reshape(C)
        io_spec = pl.BlockSpec((1, C, tile, lane), lambda b, t, w_ref: (b, 0, t, 0))
        fn = pl.pallas_call(
            _weighted_kernel,
            out_shape=out_shape,
            grid_spec=pltpu.PrefetchScalarGridSpec(
                num_scalar_prefetch=1,   # weights live in SMEM, fetched once
                grid=(B, S // tile),
                in_specs=[io_spec, io_spec],
                out_specs=pl.BlockSpec((1, 1, 1), lambda b, t, w_ref: (b, 0, 0)),
                scratch_shapes=[pltpu.VMEM((1, 1), jnp.float32)],
            ),
            compiler_params=cparams,
        )
        res = fn(w, out4, lab4)
    return res[:, 0, 0]


def _reference(output, labels, weights=None):
    """Pure-JAX reference mirroring the PyTorch forward."""
    output = output.astype(jnp.float32)
    labels = labels.astype(jnp.float32)
    if weights is None:
        return -jnp.sum(jnp.sum(labels * jnp.log(output), axis=1), axis=(1, 2))
    s = jnp.sum(labels * jnp.log(output + 1e-17), axis=1)                   # (B, H, W)
    w_sel = jnp.asarray(weights, jnp.float32)[jnp.argmax(labels, axis=1)]   # (B, H, W)
    return -jnp.sum(w_sel * s, axis=(1, 2))


def _make_inputs(key, B, C, H, W):
    k1, k2 = jax.random.split(key)
    # "output" behaves like per-pixel class probabilities -> softmax over channel
    output = jax.nn.softmax(jax.random.normal(k1, (B, C, H, W), jnp.float32), axis=1)
    # soft labels (gaussian-filtered one-hot analogue) -> softmax of another draw
    labels = jax.nn.softmax(2.0 * jax.random.normal(k2, (B, C, H, W), jnp.float32), axis=1)
    return output, labels


if __name__ == "__main__":
    key = jax.random.PRNGKey(0)

    # --- small shape, both paths ---
    B, C, H, W = 2, 4, 16, 16
    output, labels = _make_inputs(key, B, C, H, W)
    weights = jnp.arange(1, C + 1, dtype=jnp.float32) / C

    loss_unw = jax.block_until_ready(soft_cross_entropy_loss(output, labels, None))
    np.testing.assert_allclose(np.asarray(loss_unw),
                               np.asarray(_reference(output, labels, None)),
                               rtol=1e-5, atol=1e-4)

    loss_w = jax.block_until_ready(soft_cross_entropy_loss(output, labels, weights))
    np.testing.assert_allclose(np.asarray(loss_w),
                               np.asarray(_reference(output, labels, weights)),
                               rtol=1e-5, atol=1e-4)

    # --- moderately larger shape with a tiny pipeline budget to force multi-tile
    #     accumulation across the spatial grid axis (exercises init/finalize) ---
    B2, C2, H2, W2 = 2, 4, 128, 128
    output2, labels2 = _make_inputs(jax.random.PRNGKey(1), B2, C2, H2, W2)
    weights2 = jnp.arange(1, C2 + 1, dtype=jnp.float32) / C2
    small_budget = 256 * 1024  # forces several spatial tiles per batch element

    loss_unw2 = jax.block_until_ready(
        soft_cross_entropy_loss(output2, labels2, None,
                                pipeline_budget_bytes=small_budget))
    np.testing.assert_allclose(np.asarray(loss_unw2),
                               np.asarray(_reference(output2, labels2, None)),
                               rtol=5e-5, atol=1e-3)

    loss_w2 = jax.block_until_ready(
        soft_cross_entropy_loss(output2, labels2, weights2,
                                pipeline_budget_bytes=small_budget))
    np.testing.assert_allclose(np.asarray(loss_w2),
                               np.asarray(_reference(output2, labels2, weights2)),
                               rtol=5e-5, atol=1e-3)

    print("KERNEL_OK")
</pallas_src>

<mosaic_0001>
module attributes {stable_mosaic.version = 11 : i64} {
  func.func @_unweighted_kernel(%arg0: i32, %arg1: i32, %arg2: memref<1x8x128xf32, #tpu.memory_space<vmem>>, %arg3: memref<1x8x128xf32, #tpu.memory_space<vmem>>, %arg4: memref<1x1x1xf32, #tpu.memory_space<vmem>>, %arg5: memref<1x1xf32, #tpu.memory_space<vmem>>) attributes {dimension_semantics = [#tpu.dimension_semantics<parallel>, #tpu.dimension_semantics<arbitrary>], iteration_bounds = array<i64: 2, 1>, scalar_prefetch = 0 : i64, scratch_operands = 1 : i64, tpu.core_type = #tpu.core_type<tc>, window_params = [{transform_indices = @transform_0, window_bounds = array<i64: 1, 8, 128>}, {transform_indices = @transform_1, window_bounds = array<i64: 1, 8, 128>}, {transform_indices = @transform_2, window_bounds = array<i64: 1, 1, 1>}]} {
    %c0_i32 = arith.constant 0 : i32
    %0 = arith.cmpi eq, %arg1, %c0_i32 : i32
    %1 = arith.extui %0 : i1 to i32
    %c0_i32_0 = arith.constant 0 : i32
    %2 = arith.cmpi ne, %1, %c0_i32_0 : i32
    scf.if %2 {
      %cst_12 = arith.constant 0.000000e+00 : f32
      %20 = vector.broadcast %cst_12 : f32 to vector<1x1xf32>
      %c0_13 = arith.constant 0 : index
      %c0_14 = arith.constant 0 : index
      %21 = vector.load %arg5[%c0_13, %c0_14] : memref<1x1xf32, #tpu.memory_space<vmem>>, vector<1x1xf32>
      tpu.vector_store %arg5[%c0_13, %c0_14], %20 {strides = array<i32>} : memref<1x1xf32, #tpu.memory_space<vmem>>, vector<1x1xf32>,
    } else {
    }
    %c0 = arith.constant 0 : index
    %c0_1 = arith.constant 0 : index
    %c0_2 = arith.constant 0 : index
    %3 = vector.load %arg2[%c0, %c0_1, %c0_2] : memref<1x8x128xf32, #tpu.memory_space<vmem>>, vector<1x8x128xf32>
    %4 = vector.shape_cast %3 : vector<1x8x128xf32> to vector<8x128xf32>
    %c0_3 = arith.constant 0 : index
    %c0_4 = arith.constant 0 : index
    %c0_5 = arith.constant 0 : index
    %5 = vector.load %arg3[%c0_3, %c0_4, %c0_5] : memref<1x8x128xf32, #tpu.memory_space<vmem>>, vector<1x8x128xf32>
    %6 = vector.shape_cast %5 : vector<1x8x128xf32> to vector<8x128xf32>
    %c0_6 = arith.constant 0 : index
    %c0_7 = arith.constant 0 : index
    %7 = vector.load %arg5[%c0_6, %c0_7] : memref<1x1xf32, #tpu.memory_space<vmem>>, vector<1x1xf32>
    %8 = math.log %4 : vector<8x128xf32>
    %9 = arith.mulf %6, %8 : vector<8x128xf32>
    %10 = vector.shape_cast %9 : vector<8x128xf32> to vector<1x8x128xf32>
    %cst = arith.constant dense<0.000000e+00> : vector<1xf32>
    %11 = vector.multi_reduction <add>, %10, %cst [1, 2] : vector<1x8x128xf32> to vector<1xf32>
    %12 = vector.shape_cast %11 : vector<1xf32> to vector<1x1x1xf32>
    %13 = vector.extract %12[0, 0, 0] : f32 from vector<1x1x1xf32>
    %14 = vector.broadcast %13 : f32 to vector<1x1xf32>
    %15 = arith.subf %7, %14 : vector<1x1xf32>
    %c0_8 = arith.constant 0 : index
    %c0_9 = arith.constant 0 : index
    %16 = vector.load %arg5[%c0_8, %c0_9] : memref<1x1xf32, #tpu.memory_space<vmem>>, vector<1x1xf32>
    tpu.vector_store %arg5[%c0_8, %c0_9], %15 {strides = array<i32>} : memref<1x1xf32, #tpu.memory_space<vmem>>, vector<1x1xf32>,
    %c0_i32_10 = arith.constant 0 : i32
    %17 = arith.cmpi eq, %arg1, %c0_i32_10 : i32
    %18 = arith.extui %17 : i1 to i32
    %c0_i32_11 = arith.constant 0 : i32
    %19 = arith.cmpi ne, %18, %c0_i32_11 : i32
    scf.if %19 {
      %c0_12 = arith.constant 0 : index
      %c0_13 = arith.constant 0 : index
      %20 = vector.load %arg5[%c0_12, %c0_13] : memref<1x1xf32, #tpu.memory_space<vmem>>, vector<1x1xf32>
      %21 = vector.shape_cast %20 : vector<1x1xf32> to vector<1x1x1xf32>
      %c0_14 = arith.constant 0 : index
      %c0_15 = arith.constant 0 : index
      %c0_16 = arith.constant 0 : index
      %22 = vector.load %arg4[%c0_14, %c0_15, %c0_16] : memref<1x1x1xf32, #tpu.memory_space<vmem>>, vector<1x1x1xf32>
      tpu.vector_store %arg4[%c0_14, %c0_15, %c0_16], %21 {strides = array<i32>} : memref<1x1x1xf32, #tpu.memory_space<vmem>>, vector<1x1x1xf32>,
    } else {
    }
    return
  }
  func.func @transform_0(%arg0: i32, %arg1: i32) -> (i32, i32, i32) {
    %c0_i32 = arith.constant 0 : i32
    %c0_i32_0 = arith.constant 0 : i32
    return %arg0, %arg1, %c0_i32 : i32, i32, i32
  }
  func.func @transform_1(%arg0: i32, %arg1: i32) -> (i32, i32, i32) {
    %c0_i32 = arith.constant 0 : i32
    %c0_i32_0 = arith.constant 0 : i32
    return %arg0, %arg1, %c0_i32 : i32, i32, i32
  }
  func.func @transform_2(%arg0: i32, %arg1: i32) -> (i32, i32, i32) {
    %c0_i32 = arith.constant 0 : i32
    %c0_i32_0 = arith.constant 0 : i32
    %c0_i32_1 = arith.constant 0 : i32
    return %arg0, %c0_i32, %c0_i32_0 : i32, i32, i32
  }
}

</mosaic_0001>

<llo_original>
// kernel: tpu_custom_call.1
$region0: #{tpu_custom_call.1}
  #allocation0 [shape = 'u32[]', space=smem, size = 0x4, offset = 0x4, fixed_abs, tag = 'smem constant byte address 0x4 - core index']
  #allocation1 [shape = 'u32[144,128]{1,0:T(1,128)}', space=vmem, size = 0x12000, scoped, tag = 'internal scratch']
  #allocation2 [shape = 'f32[1,1]{1,0:T(1,128)}', space=vmem, size = 0x200, scoped, tag = 'scratch operand']
  %s0 = inlined_call_operand.hbm [shape: f32[2,8,128], index: 0, kind: input, shape index: {}]
  %s1 = inlined_call_operand.hbm [shape: f32[2,8,128], index: 1, kind: input, shape index: {}]
  %s2 = inlined_call_operand.vmem [shape: f32[2,1,1], index: 2, kind: output, shape index: {}]
  %s3 = sld [smem:[#allocation0]]
  $region57: #{tpu_custom_call.1} parent=0
    _
  %s5 = ssub.s32 1, %s3
  %s6 = scalar_select 0, %s5, %s3
  $region1: #{tpu_custom_call.1} parent=0
    #allocation3 [shape = 'u8[8192]{0}', space=vmem, size = 0x2000, scoped, tag = 'input window, operand 0']
    #allocation4 [shape = 's32[2]{0}', space=sflag, size = 0x8, scoped, tag = 'scoped memory for tpu_custom_call.1']
    #allocation5 [shape = 'u8[8192]{0}', space=vmem, size = 0x2000, scoped, tag = 'input window, operand 1']
    #allocation6 [shape = 's32[2]{0}', space=sflag, size = 0x8, scoped, tag = 'scoped memory for tpu_custom_call.1']
    %7 = vsyncpa [#allocation4], 0
    %s8 = scalar_lea.sflag [#allocation4], 1
    %9 = vsyncpa %s8, 0
    %10 = vsyncpa [#allocation6], 0
    %s11 = scalar_lea.sflag [#allocation6], 1
    %12 = vsyncpa %s11, 0
    loop: start=0, step=1, limit=4
    $region2: #{tpu_custom_call.1} parent=1 // loop_pre_header
      _
    $region3: #{tpu_custom_call.1} parent=1 // loop_header
      %s14 = sphi 0, %s18
      %p15 = scmp.ge.s32.totalorder %s14, 4
      %s21 = sphi 0, %s33
      %s22 = sphi 0, %s29
      %s23 = sphi 0, %s21
      %s24 = sphi 0, %s22
      %s25 = sphi 0, %s23
      %s26 = sphi 0, %s24
      %s38 = sphi 0, %s40
      %s41 = sphi 0, %s38
      %s42 = sphi 0, %s41
      %s58 = sphi 0, %s42
      %s66 = sphi 0, %s68
      %s69 = sphi 0, %s66
      %s70 = sphi 0, %s69
      %s86 = sphi 0, %s70
      %s92 = sphi 0, %s94
      %s95 = sphi 0, %s92
      %s96 = sphi 0, %s95
      %s112 = sphi 0, %s96
    $region4: #{tpu_custom_call.1} parent=1 // loop_header_branch
      %17 = sbr.rel (%p15) target = $region8
    $region5: #{tpu_custom_call.1} parent=1 // loop_body
      %s19 = ssub.s32 %s14, 1
      %s20 = ssub.s32 %s14, 2
      %s27 = sadd.s32 1, %s22
      %p28 = scmp.ge.s32.totalorder %s27, 1
      %s29 = scalar_select %p28, 0, %s27
      %s30 = sadd.s32 1, %s21
      %s31 = scalar_select %p28, %s30, %s21
      %p32 = scmp.ge.s32.totalorder %s31, 2
      %s33 = scalar_select %p32, 0, %s31
      %s34 = ssub.s32 %s21, %s33
      %s35 = ssub.s32 %s22, %s29
      %s36 = sor.u32 %s34, %s35
      %p37 = scmp.eq.s32.totalorder %s36, 0
      %s39 = sadd.s32 %s38, 1
      %s40 = scalar_select %p37, %s38, %s39
      %p43 = pneg %p37
      %p44 = scmp.eq.s32.totalorder %s14, 1
      %p45 = por %p43, %p44
      %p46 = scmp.ne.s32.totalorder %s38, %s41
      %p47 = scmp.eq.s32.totalorder %s14, 0
      %p48 = por %p46, %p47
      %p49 = scmp.ne.s32.totalorder %s38, %s41
      %p50 = scmp.eq.s32.totalorder %s19, 1
      %p51 = por %p49, %p50
      %p52 = scmp.ne.s32.totalorder %s41, %s42
      %p53 = scmp.eq.s32.totalorder %s19, 0
      %p54 = por %p52, %p53
      %p55 = scmp.ne.s32.totalorder %s41, %s42
      %p56 = scmp.eq.s32.totalorder %s20, 1
      %p57 = por %p55, %p56
      %p59 = scmp.ne.s32.totalorder %s42, %s58
      %p60 = scmp.eq.s32.totalorder %s20, 0
      %p61 = por %p59, %p60
      %s62 = ssub.s32 %s21, %s33
      %s63 = ssub.s32 %s22, %s29
      %s64 = sor.u32 %s62, %s63
      %p65 = scmp.eq.s32.totalorder %s64, 0
      %s67 = sadd.s32 %s66, 1
      %s68 = scalar_select %p65, %s66, %s67
      %p71 = pneg %p65
      %p72 = scmp.eq.s32.totalorder %s14, 1
      %p73 = por %p71, %p72
      %p74 = scmp.ne.s32.totalorder %s66, %s69
      %p75 = scmp.eq.s32.totalorder %s14, 0
      %p76 = por %p74, %p75
      %p77 = scmp.ne.s32.totalorder %s66, %s69
      %p78 = scmp.eq.s32.totalorder %s19, 1
      %p79 = por %p77, %p78
      %p80 = scmp.ne.s32.totalorder %s69, %s70
      %p81 = scmp.eq.s32.totalorder %s19, 0
      %p82 = por %p80, %p81
      %p83 = scmp.ne.s32.totalorder %s69, %s70
      %p84 = scmp.eq.s32.totalorder %s20, 1
      %p85 = por %p83, %p84
      %p87 = scmp.ne.s32.totalorder %s70, %s86
      %p88 = scmp.eq.s32.totalorder %s20, 0
      %p89 = por %p87, %p88
      %s90 = ssub.s32 %s21, %s33
      %p91 = scmp.eq.s32.totalorder %s90, 0
      %s93 = sadd.s32 %s92, 1
      %s94 = scalar_select %p91, %s92, %s93
      %p97 = pneg %p91
      %p98 = scmp.eq.s32.totalorder %s14, 1
      %p99 = por %p97, %p98
      %p100 = scmp.ne.s32.totalorder %s92, %s95
      %p101 = scmp.eq.s32.totalorder %s14, 0
      %p102 = por %p100, %p101
      %p103 = scmp.ne.s32.totalorder %s92, %s95
      %p104 = scmp.eq.s32.totalorder %s19, 1
      %p105 = por %p103, %p104
      %p106 = scmp.ne.s32.totalorder %s95, %s96
      %p107 = scmp.eq.s32.totalorder %s19, 0
      %p108 = por %p106, %p107
      %p109 = scmp.ne.s32.totalorder %s95, %s96
      %p110 = scmp.eq.s32.totalorder %s20, 1
      %p111 = por %p109, %p110
      %p113 = scmp.ne.s32.totalorder %s96, %s112
      %p114 = scmp.eq.s32.totalorder %s20, 0
      %p115 = por %p113, %p114
      %p116 = scmp.le.s32.totalorder 1, %s14
      %p117 = scmp.lt.s32.totalorder %s14, 3
      %p118 = pnand %p116, %p117
      %p119 = pneg %p118
      // Predicated region
      $region9: #{tpu_custom_call.1} parent=5 // pred_check
        _
      $region10: #{tpu_custom_call.1} parent=5 // pred_check_branch
        %121 = sbr.rel (%p118) target = $region12
      $region11: #{tpu_custom_call.1} parent=5 // pred_region
        %s122 = ssub.s32 %s14, 1
      $region12: #{tpu_custom_call.1} parent=5 // pred_fallthru
        _
      %p123 = scmp.lt.s32.totalorder %s14, 2
      // Predicated region
      $region13: #{tpu_custom_call.1} parent=5 // pred_check
        %p124 = pneg %p123
      $region14: #{tpu_custom_call.1} parent=5 // pred_check_branch
        %126 = sbr.rel (%p124) target = $region16
      $region15: #{tpu_custom_call.1} parent=5 // pred_region
        // Predicated region
        $region17: #{tpu_custom_call.1} parent=15 // pred_check
          %p127 = pneg %p48
        $region18: #{tpu_custom_call.1} parent=15 // pred_check_branch
          %129 = sbr.rel (%p127) target = $region20
        $region19: #{tpu_custom_call.1} parent=15 // pred_region
          %s130 = sand.u32 %s38, 1
          %s131 = scalar_lea.sflag [#allocation4], %s130
          %s132 = sand.u32 %s38, 1
          %s133 = smul.addr %s132, 8
          %s134 = scalar_lea.vmem [#allocation3], %s133
          %s136 = ssub.s32 128, 128
          %137 = vsyncadd %s131, %s136
          %s138 = sadd.s32 %s22, %s21
          %s139 = smul.addr %s138, 128
          %s140 = scalar_lea.hbm %s0, %s139
          %s142 = sshll.u32 %s134, 4
          %s143 = int_to_ptr.vmem [resolvable:$true] %s142
          %145 = dma.hbm_to_vmem [thread:$0]  %s140, 128, %s143, %s131
        $region20: #{tpu_custom_call.1} parent=15 // pred_fallthru
          _
        // Predicated region
        $region21: #{tpu_custom_call.1} parent=15 // pred_check
          %p146 = pneg %p76
        $region22: #{tpu_custom_call.1} parent=15 // pred_check_branch
          %148 = sbr.rel (%p146) target = $region24
        $region23: #{tpu_custom_call.1} parent=15 // pred_region
          %s149 = sand.u32 %s66, 1
          %s150 = scalar_lea.sflag [#allocation6], %s149
          %s151 = sand.u32 %s66, 1
          %s152 = smul.addr %s151, 8
          %s153 = scalar_lea.vmem [#allocation5], %s152
          %s155 = ssub.s32 128, 128
          %156 = vsyncadd %s150, %s155
          %s157 = sadd.s32 %s22, %s21
          %s158 = smul.addr %s157, 128
          %s159 = scalar_lea.hbm %s1, %s158
          %s161 = sshll.u32 %s153, 4
          %s162 = int_to_ptr.vmem [resolvable:$true] %s161
          %164 = dma.hbm_to_vmem [thread:$0]  %s159, 128, %s162, %s150
        $region24: #{tpu_custom_call.1} parent=15 // pred_fallthru
          _
      $region16: #{tpu_custom_call.1} parent=5 // pred_fallthru
        _
      %p165 = scmp.le.s32.totalorder 1, %s14
      %p166 = scmp.lt.s32.totalorder %s14, 3
      %p167 = pnand %p165, %p166
      %p168 = pneg %p167
      // Predicated region
      $region25: #{tpu_custom_call.1} parent=5 // pred_check
        _
      $region26: #{tpu_custom_call.1} parent=5 // pred_check_branch
        %170 = sbr.rel (%p167) target = $region28
      $region27: #{tpu_custom_call.1} parent=5 // pred_region
        %s171 = ssub.s32 %s14, 1
        %s172 = sand.u32 %s41, 1
        %s173 = scalar_lea.sflag [#allocation4], %s172
        %s174 = sand.u32 %s41, 1
        %s175 = smul.addr %s174, 8
        %s176 = scalar_lea.vmem [#allocation3], %s175
        // Predicated region
        $region29: #{tpu_custom_call.1} parent=27 // pred_check
          %p177 = pneg %p54
        $region30: #{tpu_custom_call.1} parent=27 // pred_check_branch
          %179 = sbr.rel (%p177) target = $region32
        $region31: #{tpu_custom_call.1} parent=27 // pred_region
          %180 = dma.done %s173, 128
        $region32: #{tpu_custom_call.1} parent=27 // pred_fallthru
          _
        %s181 = sand.u32 %s69, 1
        %s182 = scalar_lea.sflag [#allocation6], %s181
        %s183 = sand.u32 %s69, 1
        %s184 = smul.addr %s183, 8
        %s185 = scalar_lea.vmem [#allocation5], %s184
        // Predicated region
        $region33: #{tpu_custom_call.1} parent=27 // pred_check
          %p186 = pneg %p82
        $region34: #{tpu_custom_call.1} parent=27 // pred_check_branch
          %188 = sbr.rel (%p186) target = $region36
        $region35: #{tpu_custom_call.1} parent=27 // pred_region
          %189 = dma.done %s182, 128
        $region36: #{tpu_custom_call.1} parent=27 // pred_fallthru
          _
        %s190 = sand.u32 %s41, 1
        %s191 = scalar_lea.sflag [#allocation4], %s190
        %s192 = sand.u32 %s41, 1
        %s193 = smul.addr %s192, 8
        %s194 = scalar_lea.vmem [#allocation3], %s193
        %p195 = pneg %p54
        %p196 = pneg %p51
        %s197 = sand.u32 %s69, 1
        %s198 = scalar_lea.sflag [#allocation6], %s197
        %s199 = sand.u32 %s69, 1
        %s200 = smul.addr %s199, 8
        %s201 = scalar_lea.vmem [#allocation5], %s200
        %p202 = pneg %p82
        %p203 = pneg %p79
        %p204 = pneg %p108
        %p205 = pneg %p105
        %p206 = scmp.lt.s32.totalorder %s23, 1
        %s207 = scalar_select %p206, %s23, 1
        %s208 = scalar_lea.vmem %s2, %s207
        %p209 = scmp.lt.s32.totalorder %s23, 1
        %s210 = scalar_select %p209, %s23, 1
        %s211 = scalar_lea.vmem %s2, %s210
        %p212 = scmp.eq.s32.totalorder %s24, 0
        // Predicated region
        $region37: #{tpu_custom_call.1} parent=27 // pred_check
          %p213 = pneg %p212
        $region38: #{tpu_custom_call.1} parent=27 // pred_check_branch
          %215 = sbr.rel (%p213) target = $region40
        $region39: #{tpu_custom_call.1} parent=27 // pred_region
          %vm216 = vcmask 0
          %217 = vst.msk [vmem:[#allocation2] sm:$0x1] %vm216, 0.0
        $region40: #{tpu_custom_call.1} parent=27 // pred_fallthru
          _
        %v218 = vld [vmem:[%s176] sm:$0xff]
        %v219 = vld [vmem:[%s185] sm:$0xff]
        %v220 = vld [vmem:[#allocation2] sm:$0x1]
        %v221 = vlog2.pop %v218
        %v222 = vmul.f32 %v221, 0.6931472
        %v223 = vmul.f32 %v219, %v222
        %224 = vadd.xlane.f32.xlu0 %v223
        %v225 = vpop.xlane.xlu0 %224
        %v226 = vrot.slane %v225, 4
        %v227 = vadd.f32 %v225, %v226
        %v228 = vrot.slane %v227, 2
        %v229 = vadd.f32 %v227, %v228
        %v230 = vrot.slane %v229, 1
        %v231 = vadd.f32 %v229, %v230
        %s232 = vtos %v231
        %v233 = vstv %s232
        %v234 = vsub.f32 %v220, %v233
        %vm235 = vcmask 0
        %236 = vst.msk [vmem:[#allocation2] sm:$0x1] %vm235, %v234
        // Predicated region
        $region41: #{tpu_custom_call.1} parent=27 // pred_check
          %p237 = pneg %p212
        $region42: #{tpu_custom_call.1} parent=27 // pred_check_branch
          %239 = sbr.rel (%p237) target = $region44
        $region43: #{tpu_custom_call.1} parent=27 // pred_region
          %v240 = vld [vmem:[#allocation2] sm:$0x1]
          %241 = vst.msk [vmem:[%s211] sm:$0x1] %vm235, %v240
        $region44: #{tpu_custom_call.1} parent=27 // pred_fallthru
          _
        %p242 = scmp.lt.s32.totalorder %s23, 1
        %s243 = scalar_select %p242, %s23, 1
        %s244 = scalar_lea.vmem %s2, %s243
        // Predicated region
        $region45: #{tpu_custom_call.1} parent=27 // pred_check
          %p245 = pneg %p105
        $region46: #{tpu_custom_call.1} parent=27 // pred_check_branch
          %247 = sbr.rel (%p245) target = $region48
        $region47: #{tpu_custom_call.1} parent=27 // pred_region
          _
        $region48: #{tpu_custom_call.1} parent=27 // pred_fallthru
          _
      $region28: #{tpu_custom_call.1} parent=5 // pred_fallthru
        _
      %p248 = scmp.le.s32.totalorder 2, %s14
      // Predicated region
      $region49: #{tpu_custom_call.1} parent=5 // pred_check
        %p249 = pneg %p248
      $region50: #{tpu_custom_call.1} parent=5 // pred_check_branch
        %251 = sbr.rel (%p249) target = $region52
      $region51: #{tpu_custom_call.1} parent=5 // pred_region
        %s252 = ssub.s32 %s14, 2
        // Predicated region
        $region53: #{tpu_custom_call.1} parent=51 // pred_check
          %p253 = pneg %p111
        $region54: #{tpu_custom_call.1} parent=51 // pred_check_branch
          %255 = sbr.rel (%p253) target = $region56
        $region55: #{tpu_custom_call.1} parent=51 // pred_region
          %p256 = scmp.lt.s32.totalorder %s25, 1
          %s257 = scalar_select %p256, %s25, 1
          %s258 = scalar_lea.vmem %s2, %s257
        $region56: #{tpu_custom_call.1} parent=51 // pred_fallthru
          _
      $region52: #{tpu_custom_call.1} parent=5 // pred_fallthru
        _
    $region6: #{tpu_custom_call.1} parent=1 // loop_footer
      %s18 = sadd.s32 1, %s14
    $region7: #{tpu_custom_call.1} parent=1 // loop_footer_branch
      %13 = sbr.rel target = $region3
    $region8: #{tpu_custom_call.1} parent=1 // loop_exit
      _
    %259 = vsyncpa [#allocation4], 1
    %s260 = scalar_lea.sflag [#allocation4], 1
    %261 = vsyncpa %s260, 1
    %262 = vsyncpa [#allocation6], 1
    %s263 = scalar_lea.sflag [#allocation6], 1
    %264 = vsyncpa %s263, 1

</llo_original>
